<compile_context>
chip_gen: v7x
topology: tpu7x:2x2x1
jax: 0.10.0
libtpu: 0.0.40
codegen_flags: <defaults>
</compile_context>

<pallas_src>
import functools

import numpy as np
import jax
import jax.numpy as jnp
from jax.experimental import pallas as pl
from jax.experimental.pallas import tpu as pltpu


def _round_up(n: int, m: int) -> int:
    return ((n + m - 1) // m) * m


def _physical_vmem_bytes() -> int:
    try:
        return int(pltpu.get_tpu_info().vmem_capacity_bytes)
    except Exception:
        return 64 * 1024 * 1024  # conservative (v7x per-TensorCore)


def _batch_tiling(batch: int):
    """Return (padded_batch, tm). Batch is padded to a multiple of 8; large
    batches get tm such that there are >=2 grid steps (megacore)."""
    b8 = _round_up(max(batch, 8), 8)
    if b8 <= 256:
        return b8, b8
    start = min(512, (b8 // 2) // 8 * 8)
    for tm in range(start, 63, -8):
        if b8 % tm == 0:
            return b8, tm
    # awkward batch with no decent divisor: pad to a multiple of 256
    b_pad = _round_up(b8, 256)
    return b_pad, 256


# --------------------------------------------------------------------------
# Fused MLP kernel: o = L_N(ReLU(L_{N-1}(... ReLU(L_1(x)) ...)))
# refs = (x_ref, w1, b1, ..., wN, bN, o_ref); all VMEM-resident.
# --------------------------------------------------------------------------
def _fused_mlp_kernel(*refs, num_layers: int, out_cols: int):
    x_ref = refs[0]
    o_ref = refs[-1]
    operand_dtype = refs[1].dtype  # matmul operand dtype (f32 or bf16)

    h = x_ref[...]
    for i in range(num_layers):
        w = refs[1 + 2 * i][...]          # (in_p, out_p), f32 or bf16
        b = refs[2 + 2 * i][...]          # (1, out_p), f32
        lhs = h if h.dtype == operand_dtype else h.astype(operand_dtype)
        y = jnp.dot(lhs, w, preferred_element_type=jnp.float32)  # f32 accumulate
        y = y + b                         # f32 epilogue (VPU)
        if i < num_layers - 1:
            y = jnp.maximum(y, 0.0)       # ReLU on all but the last layer
            h = y.astype(operand_dtype)   # keep activations in operand dtype
        else:
            h = y                         # final layer stays f32

    # Store only the real output columns (masked store for tiny widths) —
    # avoids a padded store + extra wrapper-side HBM slice pass.
    o_ref[...] = h[:, :out_cols].astype(o_ref.dtype)


# --------------------------------------------------------------------------
# Fallback: per-layer tiled matmul (for models too big to fuse in VMEM)
# --------------------------------------------------------------------------
def _tiled_linear_kernel(x_ref, w_ref, b_ref, o_ref, acc_ref, *, apply_relu: bool):
    @pl.when(pl.program_id(2) == 0)
    def _():
        acc_ref[...] = jnp.zeros_like(acc_ref)

    lhs = x_ref[...]
    if lhs.dtype != w_ref.dtype:
        lhs = lhs.astype(w_ref.dtype)
    acc_ref[...] += jnp.dot(lhs, w_ref[...], preferred_element_type=jnp.float32)

    @pl.when(pl.program_id(2) == pl.num_programs(2) - 1)
    def _():
        y = acc_ref[...] + b_ref[...]
        if apply_relu:
            y = jnp.maximum(y, 0.0)
        o_ref[...] = y.astype(o_ref.dtype)


def _linear_layer_tiled(x, w, b, *, apply_relu, out_dtype, tm):
    M, K = x.shape
    _, N = w.shape
    tn = 256 if (N % 256 == 0 and N >= 256) else 128
    tk = 512 if (K % 512 == 0 and K >= 512) else (256 if (K % 256 == 0 and K >= 256) else 128)
    tn, tk = min(tn, N), min(tk, K)
    grid = (M // tm, N // tn, K // tk)

    kernel = functools.partial(_tiled_linear_kernel, apply_relu=apply_relu)
    return pl.pallas_call(
        kernel,
        out_shape=jax.ShapeDtypeStruct((M, N), out_dtype),
        grid=grid,
        in_specs=[
            pl.BlockSpec((tm, tk), lambda i, j, k: (i, k)),
            pl.BlockSpec((tk, tn), lambda i, j, k: (k, j)),
            pl.BlockSpec((1, tn), lambda i, j, k: (0, j)),
        ],
        out_specs=pl.BlockSpec((tm, tn), lambda i, j, k: (i, j)),
        scratch_shapes=[pltpu.VMEM((tm, tn), jnp.float32)],
        compiler_params=pltpu.CompilerParams(
            dimension_semantics=("parallel", "parallel", "arbitrary")),
    )(x, w, b)


def _forward_tiled(x_pad, prepared_params, output_size, batch, tm):
    h = x_pad
    n = len(prepared_params)
    for i, (w, b) in enumerate(prepared_params):
        last = (i == n - 1)
        out_dtype = jnp.float32 if last else w.dtype
        h = _linear_layer_tiled(h, w, b, apply_relu=not last,
                                out_dtype=out_dtype, tm=tm)
    # TODO(synk): the wrapper slice costs one extra HBM pass; acceptable on the
    # rarely-taken oversized-model fallback path.
    return h[:batch, :output_size]


# --------------------------------------------------------------------------
# Param preparation (once, outside the forward hot path)
# --------------------------------------------------------------------------
def build_params(config, key):
    """Deterministic synthetic init matching create_model's shapes
    (PyTorch (out, in) Linear convention, f32)."""
    input_size = config["input_size"]
    output_size = config["output_size"]
    hidden_sizes = []
    for k in config:
        if k.startswith("hidden_size_"):
            layer_num_str = k.split("_")[-1]
            if layer_num_str.isdigit():
                hidden_sizes.append((int(layer_num_str), config[k]))
    hidden_sizes.sort(key=lambda t: t[0])
    layer_sizes = [input_size] + [s for _, s in hidden_sizes] + [output_size]

    params = []
    for idx in range(len(layer_sizes) - 1):
        fan_in, fan_out = layer_sizes[idx], layer_sizes[idx + 1]
        key, wk, bk = jax.random.split(key, 3)
        bound = 1.0 / (fan_in ** 0.5)
        w = jax.random.uniform(wk, (fan_out, fan_in), jnp.float32, -bound, bound)
        b = jax.random.uniform(bk, (fan_out,), jnp.float32, -bound, bound)
        params.append((w, b))
    return params


def prepare_params(raw_params, lane: int = 128, matmul_dtype=jnp.float32):
    """Transpose to (in, out), reshape bias to (1, out) and zero-pad BOTH the
    input and output widths of every layer to multiples of `lane`. Padding is
    exact (padded W rows/cols and bias entries are zero). Weights are stored in
    `matmul_dtype` (use jnp.bfloat16 for the v6e/v7x fast path); biases stay f32."""
    prepared = []
    for (w, b) in raw_params:
        out_f, in_f = w.shape
        in_p = _round_up(in_f, lane)
        out_p = _round_up(out_f, lane)
        w_t = jnp.transpose(w)                                   # (in, out)
        w_pad = jnp.zeros((in_p, out_p), matmul_dtype).at[:in_f, :out_f].set(
            w_t.astype(matmul_dtype))
        b_pad = jnp.zeros((1, out_p), jnp.float32).at[0, :out_f].set(
            b.astype(jnp.float32))
        prepared.append((w_pad, b_pad))
    return prepared


def _fused_vmem_bytes(prepared_params, tm, in_p, out_cols):
    # weights/biases single-buffered (Buffered(1)); x/out tiles double-buffered;
    # + spill headroom for the widest f32 activation tile.
    wb = sum(int(w.size) * w.dtype.itemsize + int(b.size) * b.dtype.itemsize
             for w, b in prepared_params)
    x_tile = tm * in_p * 4 * 2
    out_tile = tm * _round_up(out_cols, 128) * 4 * 2
    act = tm * max(w.shape[1] for w, _ in prepared_params) * 4 * 2
    return wb + x_tile + out_tile + act


# --------------------------------------------------------------------------
# Jitted forward wrapper
# --------------------------------------------------------------------------
@functools.partial(jax.jit, static_argnames=("output_size", "force_tiled"))
def custom_linear_model_forward(x, prepared_params, *, output_size,
                                force_tiled=False):
    """x: (B, input_size) f32. prepared_params: list of (W (in_p,out_p), b (1,out_p)).
    Returns (B, output_size) f32."""
    num_layers = len(prepared_params)
    batch, in_f = x.shape
    in_p = prepared_params[0][0].shape[0]

    b_pad, tm = _batch_tiling(batch)
    if (b_pad, in_p) != (batch, in_f):
        # Exact: padded x columns hit zero-padded W rows; padded rows sliced off.
        x = jnp.pad(x, ((0, b_pad - batch), (0, in_p - in_f)))

    phys = _physical_vmem_bytes()
    need = _fused_vmem_bytes(prepared_params, tm, in_p, output_size)

    if force_tiled or need > int(0.75 * phys):
        # Model too big to keep fully resident (esp. v7x's 64 MiB VMEM):
        # per-layer tiled-K matmul path, activations round-trip HBM.
        y = _forward_tiled(x, prepared_params, output_size, batch, tm)
        return y

    grid = (b_pad // tm,)
    in_specs = [pl.BlockSpec((tm, in_p), lambda i: (i, 0))]
    flat = [x]
    for (w, b) in prepared_params:
        # Grid-invariant blocks: single-buffer (no pointless double buffering).
        in_specs.append(pl.BlockSpec(w.shape, lambda i: (0, 0),
                                     pipeline_mode=pl.Buffered(1)))
        in_specs.append(pl.BlockSpec(b.shape, lambda i: (0, 0),
                                     pipeline_mode=pl.Buffered(1)))
        flat.extend([w, b])

    vmem_limit = int(min(max(need * 1.25, 32 << 20), phys * 0.9))

    kernel = functools.partial(_fused_mlp_kernel,
                               num_layers=num_layers,
                               out_cols=output_size)

    y = pl.pallas_call(
        kernel,
        out_shape=jax.ShapeDtypeStruct((b_pad, output_size), jnp.float32),
        grid=grid,
        in_specs=in_specs,
        out_specs=pl.BlockSpec((tm, output_size), lambda i: (i, 0)),
        compiler_params=pltpu.CompilerParams(
            dimension_semantics=("parallel",),
            vmem_limit_bytes=vmem_limit),
    )(*flat)

    return y if b_pad == batch else y[:batch]


# --------------------------------------------------------------------------
# Reference (float64 numpy on host) for correctness checking
# --------------------------------------------------------------------------
def reference_forward_np(x, raw_params):
    h = np.asarray(x, dtype=np.float64)
    n = len(raw_params)
    for i, (w, b) in enumerate(raw_params):
        h = h @ np.asarray(w, np.float64).T + np.asarray(b, np.float64)
        if i < n - 1:
            h = np.maximum(h, 0.0)
    return h


if __name__ == "__main__":
    # Config analogous to what the module reads from config.json
    # (len(config) - 4 == number of linear layers == 3 here).
    config = {
        "input_size": 32,
        "hidden_size_1": 64,
        "hidden_size_2": 64,
        "output_size": 16,
        "epochs": 10,
        "batch_size": 8,
        "architecture": "mlp",
    }

    key = jax.random.PRNGKey(0)
    key, pkey, xkey = jax.random.split(key, 3)
    raw_params = build_params(config, pkey)

    batch = 8
    x = jax.random.normal(xkey, (batch, config["input_size"]), jnp.float32)
    y_ref = reference_forward_np(x, raw_params)

    # 1) Default f32 path (exact PyTorch semantics; MXU f32 multi-pass rounding).
    params_f32 = prepare_params(raw_params)                       # once, off hot path
    y = custom_linear_model_forward(x, params_f32, output_size=config["output_size"])
    jax.block_until_ready(y)
    assert y.shape == (batch, config["output_size"]) and y.dtype == jnp.float32
    assert np.allclose(np.asarray(y), y_ref, rtol=2e-3, atol=2e-3), "f32 fused mismatch"

    # 2) bf16-operand fast path (recommended on v6e/v7x; f32 accumulate + f32 epilogue).
    params_bf16 = prepare_params(raw_params, matmul_dtype=jnp.bfloat16)
    y_bf16 = custom_linear_model_forward(x, params_bf16, output_size=config["output_size"])
    jax.block_until_ready(y_bf16)
    assert np.allclose(np.asarray(y_bf16), y_ref, rtol=5e-2, atol=5e-2), "bf16 fused mismatch"

    # 3) Exercise the oversized-model fallback (tiled per-layer path) for correctness.
    y_tiled = custom_linear_model_forward(x, params_f32, output_size=config["output_size"],
                                          force_tiled=True)
    jax.block_until_ready(y_tiled)
    assert np.allclose(np.asarray(y_tiled), y_ref, rtol=2e-3, atol=2e-3), "tiled mismatch"

    # TODO(synk): training loop (SmoothL1Loss + AdamW), config.json loading and
    # device handling are out of scope for a forward-pass kernel.
    print("KERNEL_OK")
</pallas_src>

<mosaic_0001>
module attributes {stable_mosaic.version = 11 : i64} {
  func.func @_fused_mlp_kernel(%arg0: i32, %arg1: memref<8x128xf32, #tpu.memory_space<vmem>>, %arg2: memref<128x128xf32, #tpu.memory_space<vmem>>, %arg3: memref<1x128xf32, #tpu.memory_space<vmem>>, %arg4: memref<128x128xf32, #tpu.memory_space<vmem>>, %arg5: memref<1x128xf32, #tpu.memory_space<vmem>>, %arg6: memref<128x128xf32, #tpu.memory_space<vmem>>, %arg7: memref<1x128xf32, #tpu.memory_space<vmem>>, %arg8: memref<8x16xf32, #tpu.memory_space<vmem>>) attributes {dimension_semantics = [#tpu.dimension_semantics<parallel>], iteration_bounds = array<i64: 1>, scalar_prefetch = 0 : i64, scratch_operands = 0 : i64, tpu.core_type = #tpu.core_type<tc>, window_params = [{transform_indices = @transform_0, window_bounds = array<i64: 8, 128>}, {pipeline_mode = #tpu.pipeline_mode<synchronous>, transform_indices = @transform_1, window_bounds = array<i64: 128, 128>}, {pipeline_mode = #tpu.pipeline_mode<synchronous>, transform_indices = @transform_2, window_bounds = array<i64: 1, 128>}, {pipeline_mode = #tpu.pipeline_mode<synchronous>, transform_indices = @transform_3, window_bounds = array<i64: 128, 128>}, {pipeline_mode = #tpu.pipeline_mode<synchronous>, transform_indices = @transform_4, window_bounds = array<i64: 1, 128>}, {pipeline_mode = #tpu.pipeline_mode<synchronous>, transform_indices = @transform_5, window_bounds = array<i64: 128, 128>}, {pipeline_mode = #tpu.pipeline_mode<synchronous>, transform_indices = @transform_6, window_bounds = array<i64: 1, 128>}, {transform_indices = @transform_7, window_bounds = array<i64: 8, 16>}]} {
    %c0 = arith.constant 0 : index
    %c0_0 = arith.constant 0 : index
    %0 = vector.load %arg1[%c0, %c0_0] : memref<8x128xf32, #tpu.memory_space<vmem>>, vector<8x128xf32>
    %c0_1 = arith.constant 0 : index
    %c0_2 = arith.constant 0 : index
    %1 = vector.load %arg2[%c0_1, %c0_2] : memref<128x128xf32, #tpu.memory_space<vmem>>, vector<128x128xf32>
    %c0_3 = arith.constant 0 : index
    %c0_4 = arith.constant 0 : index
    %2 = vector.load %arg3[%c0_3, %c0_4] : memref<1x128xf32, #tpu.memory_space<vmem>>, vector<1x128xf32>
    %cst = arith.constant dense<0.000000e+00> : vector<8x128xf32>
    %3 = tpu.matmul %0, %1, %cst {dimension_numbers = #tpu.dot_dimension_numbers<[1], [0], [0], [1], [0, 0, 1, 1], [], []>} : vector<8x128xf32>, vector<128x128xf32>, vector<8x128xf32> -> vector<8x128xf32>
    %4 = vector.broadcast %2 : vector<1x128xf32> to vector<8x128xf32>
    %5 = arith.addf %3, %4 : vector<8x128xf32>
    %cst_5 = arith.constant 0.000000e+00 : f32
    %6 = vector.broadcast %cst_5 : f32 to vector<8x128xf32>
    %7 = arith.maximumf %5, %6 : vector<8x128xf32>
    %c0_6 = arith.constant 0 : index
    %c0_7 = arith.constant 0 : index
    %8 = vector.load %arg4[%c0_6, %c0_7] : memref<128x128xf32, #tpu.memory_space<vmem>>, vector<128x128xf32>
    %c0_8 = arith.constant 0 : index
    %c0_9 = arith.constant 0 : index
    %9 = vector.load %arg5[%c0_8, %c0_9] : memref<1x128xf32, #tpu.memory_space<vmem>>, vector<1x128xf32>
    %cst_10 = arith.constant dense<0.000000e+00> : vector<8x128xf32>
    %10 = tpu.matmul %7, %8, %cst_10 {dimension_numbers = #tpu.dot_dimension_numbers<[1], [0], [0], [1], [0, 0, 1, 1], [], []>} : vector<8x128xf32>, vector<128x128xf32>, vector<8x128xf32> -> vector<8x128xf32>
    %11 = vector.broadcast %9 : vector<1x128xf32> to vector<8x128xf32>
    %12 = arith.addf %10, %11 : vector<8x128xf32>
    %cst_11 = arith.constant 0.000000e+00 : f32
    %13 = vector.broadcast %cst_11 : f32 to vector<8x128xf32>
    %14 = arith.maximumf %12, %13 : vector<8x128xf32>
    %c0_12 = arith.constant 0 : index
    %c0_13 = arith.constant 0 : index
    %15 = vector.load %arg6[%c0_12, %c0_13] : memref<128x128xf32, #tpu.memory_space<vmem>>, vector<128x128xf32>
    %c0_14 = arith.constant 0 : index
    %c0_15 = arith.constant 0 : index
    %16 = vector.load %arg7[%c0_14, %c0_15] : memref<1x128xf32, #tpu.memory_space<vmem>>, vector<1x128xf32>
    %cst_16 = arith.constant dense<0.000000e+00> : vector<8x128xf32>
    %17 = tpu.matmul %14, %15, %cst_16 {dimension_numbers = #tpu.dot_dimension_numbers<[1], [0], [0], [1], [0, 0, 1, 1], [], []>} : vector<8x128xf32>, vector<128x128xf32>, vector<8x128xf32> -> vector<8x128xf32>
    %18 = vector.broadcast %16 : vector<1x128xf32> to vector<8x128xf32>
    %19 = arith.addf %17, %18 : vector<8x128xf32>
    %20 = vector.extract_strided_slice %19 {offsets = [0, 0], sizes = [8, 16], strides = [1, 1]} : vector<8x128xf32> to vector<8x16xf32>
    %c0_17 = arith.constant 0 : index
    %c0_18 = arith.constant 0 : index
    %21 = vector.load %arg8[%c0_17, %c0_18] : memref<8x16xf32, #tpu.memory_space<vmem>>, vector<8x16xf32>
    tpu.vector_store %arg8[%c0_17, %c0_18], %20 {strides = array<i32>} : memref<8x16xf32, #tpu.memory_space<vmem>>, vector<8x16xf32>,
    return
  }
  func.func @transform_0(%arg0: i32) -> (i32, i32) {
    %c0_i32 = arith.constant 0 : i32
    %c0_i32_0 = arith.constant 0 : i32
    return %arg0, %c0_i32 : i32, i32
  }
  func.func @transform_1(%arg0: i32) -> (i32, i32) {
    %c0_i32 = arith.constant 0 : i32
    %c0_i32_0 = arith.constant 0 : i32
    %c0_i32_1 = arith.constant 0 : i32
    return %c0_i32, %c0_i32_0 : i32, i32
  }
  func.func @transform_2(%arg0: i32) -> (i32, i32) {
    %c0_i32 = arith.constant 0 : i32
    %c0_i32_0 = arith.constant 0 : i32
    %c0_i32_1 = arith.constant 0 : i32
    return %c0_i32, %c0_i32_0 : i32, i32
  }
  func.func @transform_3(%arg0: i32) -> (i32, i32) {
    %c0_i32 = arith.constant 0 : i32
    %c0_i32_0 = arith.constant 0 : i32
    %c0_i32_1 = arith.constant 0 : i32
    return %c0_i32, %c0_i32_0 : i32, i32
  }
  func.func @transform_4(%arg0: i32) -> (i32, i32) {
    %c0_i32 = arith.constant 0 : i32
    %c0_i32_0 = arith.constant 0 : i32
    %c0_i32_1 = arith.constant 0 : i32
    return %c0_i32, %c0_i32_0 : i32, i32
  }
  func.func @transform_5(%arg0: i32) -> (i32, i32) {
    %c0_i32 = arith.constant 0 : i32
    %c0_i32_0 = arith.constant 0 : i32
    %c0_i32_1 = arith.constant 0 : i32
    return %c0_i32, %c0_i32_0 : i32, i32
  }
  func.func @transform_6(%arg0: i32) -> (i32, i32) {
    %c0_i32 = arith.constant 0 : i32
    %c0_i32_0 = arith.constant 0 : i32
    %c0_i32_1 = arith.constant 0 : i32
    return %c0_i32, %c0_i32_0 : i32, i32
  }
  func.func @transform_7(%arg0: i32) -> (i32, i32) {
    %c0_i32 = arith.constant 0 : i32
    %c0_i32_0 = arith.constant 0 : i32
    return %arg0, %c0_i32 : i32, i32
  }
}

</mosaic_0001>

<llo_original>
// kernel: custom_linear_model_forward.1
$region0: #{custom_linear_model_forward.1}
  #allocation0 [shape = 'u32[]', space=smem, size = 0x4, offset = 0x4, fixed_abs, tag = 'smem constant byte address 0x4 - core index']
  #allocation1 [shape = 'u32[144,128]{1,0:T(1,128)}', space=vmem, size = 0x12000, scoped, tag = 'internal scratch']
  %s0 = inlined_call_operand.vmem [shape: f32[8,128], index: 0, kind: input, shape index: {}]
  %s1 = inlined_call_operand.hbm [shape: f32[128,128], index: 1, kind: input, shape index: {}]
  %s2 = inlined_call_operand.vmem [shape: f32[1,128], index: 2, kind: input, shape index: {}]
  %s3 = inlined_call_operand.hbm [shape: f32[128,128], index: 3, kind: input, shape index: {}]
  %s4 = inlined_call_operand.vmem [shape: f32[1,128], index: 4, kind: input, shape index: {}]
  %s5 = inlined_call_operand.hbm [shape: f32[128,128], index: 5, kind: input, shape index: {}]
  %s6 = inlined_call_operand.vmem [shape: f32[1,128], index: 6, kind: input, shape index: {}]
  %s7 = inlined_call_operand.hbm [shape: f32[8,16], index: 7, kind: output, shape index: {}]
  %s8 = sld [smem:[#allocation0]]
  $region50: #{custom_linear_model_forward.1} parent=0
    _
  %s10 = ssub.s32 1, %s8
  %s11 = scalar_select 0, %s10, %s8
  $region1: #{custom_linear_model_forward.1} parent=0
    #allocation2 [shape = 'u8[65536]{0}', space=vmem, size = 0x10000, scoped, tag = 'input window, operand 1, single buffered']
    #allocation3 [shape = 's32[1]{0}', space=sflag, size = 0x4, scoped, tag = 'scoped memory for custom_linear_model_forward.1']
    #allocation4 [shape = 's32[1]{0}', space=sflag, size = 0x4, scoped, tag = 'scoped memory for custom_linear_model_forward.1']
    #allocation5 [shape = 'u8[65536]{0}', space=vmem, size = 0x10000, scoped, tag = 'input window, operand 3, single buffered']
    #allocation6 [shape = 's32[1]{0}', space=sflag, size = 0x4, scoped, tag = 'scoped memory for custom_linear_model_forward.1']
    #allocation7 [shape = 'u8[65536]{0}', space=vmem, size = 0x10000, scoped, tag = 'input window, operand 5, single buffered']
    #allocation8 [shape = 'u8[4096]{0}', space=vmem, size = 0x1000, scoped, tag = 'output window, operand 0, single buffered']
    %12 = vsyncpa [#allocation3], 0
    %13 = vsyncpa [#allocation6], 0
    %14 = vsyncpa [#allocation4], 0
    // Predicated region
    $region2: #{custom_linear_model_forward.1} parent=1 // pred_check
      _
    $region3: #{custom_linear_model_forward.1} parent=1 // pred_check_branch
      %16 = sbr.rel (0) target = $region5
    $region4: #{custom_linear_model_forward.1} parent=1 // pred_region
      _
    $region5: #{custom_linear_model_forward.1} parent=1 // pred_fallthru
      _
    // Predicated region
    $region6: #{custom_linear_model_forward.1} parent=1 // pred_check
      _
    $region7: #{custom_linear_model_forward.1} parent=1 // pred_check_branch
      %18 = sbr.rel (0) target = $region9
    $region8: #{custom_linear_model_forward.1} parent=1 // pred_region
      %s20 = ssub.s32 2048, 2048
      %21 = vsyncadd [#allocation3], %s20
      %s22 = sshll.u32 [#allocation2], 4
      %s23 = int_to_ptr.vmem [resolvable:$true] %s22
      %28 = dma.hbm_to_vmem [thread:$0]  %s1, 2048, %s23, [#allocation3], 128, 128, 8
    $region9: #{custom_linear_model_forward.1} parent=1 // pred_fallthru
      _
    // Predicated region
    $region10: #{custom_linear_model_forward.1} parent=1 // pred_check
      _
    $region11: #{custom_linear_model_forward.1} parent=1 // pred_check_branch
      %30 = sbr.rel (0) target = $region13
    $region12: #{custom_linear_model_forward.1} parent=1 // pred_region
      _
    $region13: #{custom_linear_model_forward.1} parent=1 // pred_fallthru
      _
    // Predicated region
    $region14: #{custom_linear_model_forward.1} parent=1 // pred_check
      _
    $region15: #{custom_linear_model_forward.1} parent=1 // pred_check_branch
      %32 = sbr.rel (0) target = $region17
    $region16: #{custom_linear_model_forward.1} parent=1 // pred_region
      %s34 = ssub.s32 2048, 2048
      %35 = vsyncadd [#allocation6], %s34
      %s36 = sshll.u32 [#allocation5], 4
      %s37 = int_to_ptr.vmem [resolvable:$true] %s36
      %42 = dma.hbm_to_vmem [thread:$0]  %s3, 2048, %s37, [#allocation6], 128, 128, 8
    $region17: #{custom_linear_model_forward.1} parent=1 // pred_fallthru
      _
    // Predicated region
    $region18: #{custom_linear_model_forward.1} parent=1 // pred_check
      _
    $region19: #{custom_linear_model_forward.1} parent=1 // pred_check_branch
      %44 = sbr.rel (0) target = $region21
    $region20: #{custom_linear_model_forward.1} parent=1 // pred_region
      _
    $region21: #{custom_linear_model_forward.1} parent=1 // pred_fallthru
      _
    // Predicated region
    $region22: #{custom_linear_model_forward.1} parent=1 // pred_check
      _
    $region23: #{custom_linear_model_forward.1} parent=1 // pred_check_branch
      %46 = sbr.rel (0) target = $region25
    $region24: #{custom_linear_model_forward.1} parent=1 // pred_region
      %s48 = ssub.s32 2048, 2048
      %49 = vsyncadd [#allocation6], %s48
      %s50 = sshll.u32 [#allocation7], 4
      %s51 = int_to_ptr.vmem [resolvable:$true] %s50
      %56 = dma.hbm_to_vmem [thread:$0]  %s5, 2048, %s51, [#allocation6], 128, 128, 8
    $region25: #{custom_linear_model_forward.1} parent=1 // pred_fallthru
      _
    // Predicated region
    $region26: #{custom_linear_model_forward.1} parent=1 // pred_check
      _
    $region27: #{custom_linear_model_forward.1} parent=1 // pred_check_branch
      %58 = sbr.rel (0) target = $region29
    $region28: #{custom_linear_model_forward.1} parent=1 // pred_region
      _
    $region29: #{custom_linear_model_forward.1} parent=1 // pred_fallthru
      _
    // Predicated region
    $region30: #{custom_linear_model_forward.1} parent=1 // pred_check
      _
    $region31: #{custom_linear_model_forward.1} parent=1 // pred_check_branch
      %60 = sbr.rel (0) target = $region33
    $region32: #{custom_linear_model_forward.1} parent=1 // pred_region
      %61 = dma.done [#allocation3], 2048
    $region33: #{custom_linear_model_forward.1} parent=1 // pred_fallthru
      _
    // Predicated region
    $region34: #{custom_linear_model_forward.1} parent=1 // pred_check
      _
    $region35: #{custom_linear_model_forward.1} parent=1 // pred_check_branch
      %63 = sbr.rel (0) target = $region37
    $region36: #{custom_linear_model_forward.1} parent=1 // pred_region
      %64 = dma.done [#allocation6], 2048
    $region37: #{custom_linear_model_forward.1} parent=1 // pred_fallthru
      _
    // Predicated region
    $region38: #{custom_linear_model_forward.1} parent=1 // pred_check
      _
    $region39: #{custom_linear_model_forward.1} parent=1 // pred_check_branch
      %66 = sbr.rel (0) target = $region41
    $region40: #{custom_linear_model_forward.1} parent=1 // pred_region
      %67 = dma.done [#allocation6], 2048
    $region41: #{custom_linear_model_forward.1} parent=1 // pred_fallthru
      _
    %v68 = vld [vmem:[%s0] sm:$0xff]
    %v69 = vld [vmem:[#allocation2] sm:$0xff]
    %v70 = vld [vmem:[#allocation2 + $0x8] sm:$0xff]
    %v71 = vld [vmem:[#allocation2 + $0x10] sm:$0xff]
    %v72 = vld [vmem:[#allocation2 + $0x18] sm:$0xff]
    %v73 = vld [vmem:[#allocation2 + $0x20] sm:$0xff]
    %v74 = vld [vmem:[#allocation2 + $0x28] sm:$0xff]
    %v75 = vld [vmem:[#allocation2 + $0x30] sm:$0xff]
    %v76 = vld [vmem:[#allocation2 + $0x38] sm:$0xff]
    %v77 = vld [vmem:[#allocation2 + $0x40] sm:$0xff]
    %v78 = vld [vmem:[#allocation2 + $0x48] sm:$0xff]
    %v79 = vld [vmem:[#allocation2 + $0x50] sm:$0xff]
    %v80 = vld [vmem:[#allocation2 + $0x58] sm:$0xff]
    %v81 = vld [vmem:[#allocation2 + $0x60] sm:$0xff]
    %v82 = vld [vmem:[#allocation2 + $0x68] sm:$0xff]
    %v83 = vld [vmem:[#allocation2 + $0x70] sm:$0xff]
    %v84 = vld [vmem:[#allocation2 + $0x78] sm:$0xff]
    %v85 = vld [vmem:[%s2] sm:$0x1]
    %v87 = vlaneseq
    %v88 = vshrl.u32 %v87, 7
    %v89 = vsub.s32 0, %v88
    %v90 = vrot.slane %v85, %v89
    %92 = vmatprep.subr.mxu0 0.0
    %93 = vmatpush1.msra.mxu0 %v69
    %94 = vmatprep.subr.mxu0 0.0
    %95 = vmatpush1.msra.mxu0 %v70
    %96 = vmatprep.subr.mxu0 0.0
    %97 = vmatpush1.msra.mxu0 %v71
    %98 = vmatprep.subr.mxu0 0.0
    %99 = vmatpush1.msra.mxu0 %v72
    %100 = vmatprep.subr.mxu0 0.0
    %101 = vmatpush1.msra.mxu0 %v73
    %102 = vmatprep.subr.mxu0 0.0
    %103 = vmatpush1.msra.mxu0 %v74
    %104 = vmatprep.subr.mxu0 0.0
    %105 = vmatpush1.msra.mxu0 %v75
    %106 = vmatprep.subr.mxu0 0.0
    %107 = vmatpush1.msra.mxu0 %v76
    %108 = vmatprep.subr.mxu0 0.0
    %109 = vmatpush1.msra.mxu0 %v77
    %110 = vmatprep.subr.mxu0 0.0
    %111 = vmatpush1.msra.mxu0 %v78
    %112 = vmatprep.subr.mxu0 0.0
    %113 = vmatpush1.msra.mxu0 %v79
    %114 = vmatprep.subr.mxu0 0.0
    %115 = vmatpush1.msra.mxu0 %v80
    %116 = vmatprep.subr.mxu0 0.0
    %117 = vmatpush1.msra.mxu0 %v81
    %118 = vmatprep.subr.mxu0 0.0
    %119 = vmatpush1.msra.mxu0 %v82
    %120 = vmatprep.subr.mxu0 0.0
    %121 = vmatpush1.msra.mxu0 %v83
    %122 = vmatprep.subr.mxu0 0.0
    %123 = vmatpush1.msra.mxu0 %v84
    %124 = vmatprep.subr.mxu0 0.0
    %125 = vmatpush1.msra.mxu0 0.0
    %126 = vmatprep.subr.mxu0 0.0
    %127 = vmatpush1.msra.mxu0 0.0
    %128 = vmatprep.subr.mxu0 0.0
    %129 = vmatpush1.msra.mxu0 0.0
    %130 = vmatprep.subr.mxu0 0.0
    %131 = vmatpush1.msra.mxu0 0.0
    %132 = vmatprep.subr.mxu0 0.0
    %133 = vmatpush1.msra.mxu0 0.0
    %134 = vmatprep.subr.mxu0 0.0
    %135 = vmatpush1.msra.mxu0 0.0
    %136 = vmatprep.subr.mxu0 0.0
    %137 = vmatpush1.msra.mxu0 0.0
    %138 = vmatprep.subr.mxu0 0.0
    %139 = vmatpush1.msra.mxu0 0.0
    %140 = vmatprep.subr.mxu0 0.0
    %141 = vmatpush1.msra.mxu0 0.0
    %142 = vmatprep.subr.mxu0 0.0
    %143 = vmatpush1.msra.mxu0 0.0
    %144 = vmatprep.subr.mxu0 0.0
    %145 = vmatpush1.msra.mxu0 0.0
    %146 = vmatprep.subr.mxu0 0.0
    %147 = vmatpush1.msra.mxu0 0.0
    %148 = vmatprep.subr.mxu0 0.0
    %149 = vmatpush1.msra.mxu0 0.0
    %150 = vmatprep.subr.mxu0 0.0
    %151 = vmatpush1.msra.mxu0 0.0
    %152 = vmatprep.subr.mxu0 0.0
    %153 = vmatpush1.msra.mxu0 0.0
    %154 = vmatprep.subr.mxu0 0.0
    %155 = vmatpush1.msra.mxu0 0.0
    %156 = vmatprep.mubr.f32.mxu0 0.0
    %157 = vmatmul.mubr.f32.gmra.mrb[0].mxu0 %v68
    %v158 = vpop.f32.mrb[0].mxu0
    %v159 = vadd.f32 %v90, %v158
    %v160 = vpop.f32.mrb[0].mxu0
    %161 = vdwg.mxu0
    %v162 = vmax.f32 %v159, 0.0
    %v163 = vld [vmem:[#allocation5] sm:$0xff]
    %v164 = vld [vmem:[#allocation5 + $0x8] sm:$0xff]
    %v165 = vld [vmem:[#allocation5 + $0x10] sm:$0xff]
    %v166 = vld [vmem:[#allocation5 + $0x18] sm:$0xff]
    %v167 = vld [vmem:[#allocation5 + $0x20] sm:$0xff]
    %v168 = vld [vmem:[#allocation5 + $0x28] sm:$0xff]
    %v169 = vld [vmem:[#allocation5 + $0x30] sm:$0xff]
    %v170 = vld [vmem:[#allocation5 + $0x38] sm:$0xff]
    %v171 = vld [vmem:[#allocation5 + $0x40] sm:$0xff]
    %v172 = vld [vmem:[#allocation5 + $0x48] sm:$0xff]
    %v173 = vld [vmem:[#allocation5 + $0x50] sm:$0xff]
    %v174 = vld [vmem:[#allocation5 + $0x58] sm:$0xff]
    %v175 = vld [vmem:[#allocation5 + $0x60] sm:$0xff]
    %v176 = vld [vmem:[#allocation5 + $0x68] sm:$0xff]
    %v177 = vld [vmem:[#allocation5 + $0x70] sm:$0xff]
    %v178 = vld [vmem:[#allocation5 + $0x78] sm:$0xff]
    %v179 = vld [vmem:[%s4] sm:$0x1]
    %v181 = vlaneseq
    %v182 = vshrl.u32 %v181, 7
    %v183 = vsub.s32 0, %v182
    %v184 = vrot.slane %v179, %v183
    %186 = vmatprep.subr.mxu0 0.0
    %187 = vmatpush1.msra.mxu0 %v163
    %188 = vmatprep.subr.mxu0 0.0
    %189 = vmatpush1.msra.mxu0 %v164
    %190 = vmatprep.subr.mxu0 0.0
    %191 = vmatpush1.msra.mxu0 %v165
    %192 = vmatprep.subr.mxu0 0.0
    %193 = vmatpush1.msra.mxu0 %v166
    %194 = vmatprep.subr.mxu0 0.0
    %195 = vmatpush1.msra.mxu0 %v167
    %196 = vmatprep.subr.mxu0 0.0
    %197 = vmatpush1.msra.mxu0 %v168
    %198 = vmatprep.subr.mxu0 0.0
    %199 = vmatpush1.msra.mxu0 %v169
    %200 = vmatprep.subr.mxu0 0.0
    %201 = vmatpush1.msra.mxu0 %v170
    %202 = vmatprep.subr.mxu0 0.0
    %203 = vmatpush1.msra.mxu0 %v171
    %204 = vmatprep.subr.mxu0 0.0
    %205 = vmatpush1.msra.mxu0 %v172
    %206 = vmatprep.subr.mxu0 0.0
    %207 = vmatpush1.msra.mxu0 %v173
    %208 = vmatprep.subr.mxu0 0.0
    %209 = vmatpush1.msra.mxu0 %v174
    %210 = vmatprep.subr.mxu0 0.0
    %211 = vmatpush1.msra.mxu0 %v175
    %212 = vmatprep.subr.mxu0 0.0
    %213 = vmatpush1.msra.mxu0 %v176
    %214 = vmatprep.subr.mxu0 0.0
    %215 = vmatpush1.msra.mxu0 %v177
    %216 = vmatprep.subr.mxu0 0.0
    %217 = vmatpush1.msra.mxu0 %v178
    %218 = vmatprep.subr.mxu0 0.0
    %219 = vmatpush1.msra.mxu0 0.0
    %220 = vmatprep.subr.mxu0 0.0
    %221 = vmatpush1.msra.mxu0 0.0
    %222 = vmatprep.subr.mxu0 0.0
    %223 = vmatpush1.msra.mxu0 0.0
    %224 = vmatprep.subr.mxu0 0.0
    %225 = vmatpush1.msra.mxu0 0.0
    %226 = vmatprep.subr.mxu0 0.0
    %227 = vmatpush1.msra.mxu0 0.0
    %228 = vmatprep.subr.mxu0 0.0
    %229 = vmatpush1.msra.mxu0 0.0
    %230 = vmatprep.subr.mxu0 0.0
    %231 = vmatpush1.msra.mxu0 0.0
    %232 = vmatprep.subr.mxu0 0.0
    %233 = vmatpush1.msra.mxu0 0.0
    %234 = vmatprep.subr.mxu0 0.0
    %235 = vmatpush1.msra.mxu0 0.0
    %236 = vmatprep.subr.mxu0 0.0
    %237 = vmatpush1.msra.mxu0 0.0
    %238 = vmatprep.subr.mxu0 0.0
    %239 = vmatpush1.msra.mxu0 0.0
    %240 = vmatprep.subr.mxu0 0.0
    %241 = vmatpush1.msra.mxu0 0.0
    %242 = vmatprep.subr.mxu0 0.0
    %243 = vmatpush1.msra.mxu0 0.0
    %244 = vmatprep.subr.mxu0 0.0
    %245 = vmatpush1.msra.mxu0 0.0
    %246 = vmatprep.subr.mxu0 0.0
    %247 = vmatpush1.msra.mxu0 0.0
    %248 = vmatprep.subr.mxu0 0.0
    %249 = vmatpush1.msra.mxu0 0.0
    %250 = vmatprep.mubr.f32.mxu0 0.0
    %251 = vmatmul.mubr.f32.gmra.mrb[0].mxu0 %v162
    %v252 = vpop.f32.mrb[0].mxu0
    %v253 = vadd.f32 %v184, %v252
    %v254 = vpop.f32.mrb[0].mxu0
    %255 = vdwg.mxu0
    %v256 = vmax.f32 %v253, 0.0
    %v257 = vld [vmem:[#allocation7] sm:$0xff]
    %v258 = vld [vmem:[#allocation7 + $0x8] sm:$0xff]
    %v259 = vld [vmem:[#allocation7 + $0x10] sm:$0xff]
    %v260 = vld [vmem:[#allocation7 + $0x18] sm:$0xff]
    %v261 = vld [vmem:[#allocation7 + $0x20] sm:$0xff]
    %v262 = vld [vmem:[#allocation7 + $0x28] sm:$0xff]
    %v263 = vld [vmem:[#allocation7 + $0x30] sm:$0xff]
    %v264 = vld [vmem:[#allocation7 + $0x38] sm:$0xff]
    %v265 = vld [vmem:[#allocation7 + $0x40] sm:$0xff]
    %v266 = vld [vmem:[#allocation7 + $0x48] sm:$0xff]
    %v267 = vld [vmem:[#allocation7 + $0x50] sm:$0xff]
    %v268 = vld [vmem:[#allocation7 + $0x58] sm:$0xff]
    %v269 = vld [vmem:[#allocation7 + $0x60] sm:$0xff]
    %v270 = vld [vmem:[#allocation7 + $0x68] sm:$0xff]
    %v271 = vld [vmem:[#allocation7 + $0x70] sm:$0xff]
    %v272 = vld [vmem:[#allocation7 + $0x78] sm:$0xff]
    %v273 = vld [vmem:[%s6] sm:$0x1]
    %v275 = vlaneseq
    %v276 = vshrl.u32 %v275, 7
    %v277 = vsub.s32 0, %v276
    %v278 = vrot.slane %v273, %v277
    %280 = vmatprep.subr.mxu0 0.0
    %281 = vmatpush1.msra.mxu0 %v257
    %282 = vmatprep.subr.mxu0 0.0
    %283 = vmatpush1.msra.mxu0 %v258
    %284 = vmatprep.subr.mxu0 0.0
    %285 = vmatpush1.msra.mxu0 %v259
    %286 = vmatprep.subr.mxu0 0.0
    %287 = vmatpush1.msra.mxu0 %v260
    %288 = vmatprep.subr.mxu0 0.0
    %289 = vmatpush1.msra.mxu0 %v261
    %290 = vmatprep.subr.mxu0 0.0
    %291 = vmatpush1.msra.mxu0 %v262
    %292 = vmatprep.subr.mxu0 0.0
    %293 = vmatpush1.msra.mxu0 %v263
    %294 = vmatprep.subr.mxu0 0.0
    %295 = vmatpush1.msra.mxu0 %v264
    %296 = vmatprep.subr.mxu0 0.0
    %297 = vmatpush1.msra.mxu0 %v265
    %298 = vmatprep.subr.mxu0 0.0
    %299 = vmatpush1.msra.mxu0 %v266
    %300 = vmatprep.subr.mxu0 0.0
    %301 = vmatpush1.msra.mxu0 %v267
    %302 = vmatprep.subr.mxu0 0.0
    %303 = vmatpush1.msra.mxu0 %v268
    %304 = vmatprep.subr.mxu0 0.0
    %305 = vmatpush1.msra.mxu0 %v269
    %306 = vmatprep.subr.mxu0 0.0
    %307 = vmatpush1.msra.mxu0 %v270
    %308 = vmatprep.subr.mxu0 0.0
    %309 = vmatpush1.msra.mxu0 %v271
    %310 = vmatprep.subr.mxu0 0.0
    %311 = vmatpush1.msra.mxu0 %v272
    %312 = vmatprep.subr.mxu0 0.0
    %313 = vmatpush1.msra.mxu0 0.0
    %314 = vmatprep.subr.mxu0 0.0
    %315 = vmatpush1.msra.mxu0 0.0
    %316 = vmatprep.subr.mxu0 0.0
    %317 = vmatpush1.msra.mxu0 0.0
    %318 = vmatprep.subr.mxu0 0.0
    %319 = vmatpush1.msra.mxu0 0.0
    %320 = vmatprep.subr.mxu0 0.0
    %321 = vmatpush1.msra.mxu0 0.0
    %322 = vmatprep.subr.mxu0 0.0
    %323 = vmatpush1.msra.mxu0 0.0
    %324 = vmatprep.subr.mxu0 0.0
    %325 = vmatpush1.msra.mxu0 0.0
    %326 = vmatprep.subr.mxu0 0.0
    %327 = vmatpush1.msra.mxu0 0.0
    %328 = vmatprep.subr.mxu0 0.0
    %329 = vmatpush1.msra.mxu0 0.0
    %330 = vmatprep.subr.mxu0 0.0
    %331 = vmatpush1.msra.mxu0 0.0
    %332 = vmatprep.subr.mxu0 0.0
    %333 = vmatpush1.msra.mxu0 0.0
    %334 = vmatprep.subr.mxu0 0.0
    %335 = vmatpush1.msra.mxu0 0.0
    %336 = vmatprep.subr.mxu0 0.0
    %337 = vmatpush1.msra.mxu0 0.0
    %338 = vmatprep.subr.mxu0 0.0
    %339 = vmatpush1.msra.mxu0 0.0
    %340 = vmatprep.subr.mxu0 0.0
    %341 = vmatpush1.msra.mxu0 0.0
    %342 = vmatprep.subr.mxu0 0.0
    %343 = vmatpush1.msra.mxu0 0.0
    %344 = vmatprep.mubr.f32.mxu0 0.0
    %345 = vmatmul.mubr.f32.gmra.mrb[0].mxu0 %v256
    %v346 = vpop.f32.mrb[0].mxu0
    %v347 = vadd.f32 %v278, %v346
    %v348 = vpop.f32.mrb[0].mxu0
    %349 = vdwg.mxu0
    %vm350 = vcmask 130048
    %351 = vst.msk [vmem:[#allocation8] sm:$0xff] %vm350, %v347
    // Predicated region
    $region42: #{custom_linear_model_forward.1} parent=1 // pred_check
      _
    $region43: #{custom_linear_model_forward.1} parent=1 // pred_check_branch
      %353 = sbr.rel (0) target = $region45
    $region44: #{custom_linear_model_forward.1} parent=1 // pred_region
      %s355 = ssub.s32 128, 128
      %356 = vsyncadd [#allocation4], %s355
      %s358 = sshll.u32 [#allocation8], 4
      %s359 = int_to_ptr.vmem [resolvable:$true] %s358
      %361 = dma.vmem_to_hbm [thread:$0]  %s359, 128, %s7, [#allocation4]
    $region45: #{custom_linear_model_forward.1} parent=1 // pred_fallthru
      _
    // Predicated region
    $region46: #{custom_linear_model_forward.1} parent=1 // pred_check
      _
    $region47: #{custom_linear_model_forward.1} parent=1 // pred_check_branch
      %363 = sbr.rel (0) target = $region49
    $region48: #{custom_linear_model_forward.1} parent=1 // pred_region
      %364 = dma.done [#allocation4], 128
    $region49: #{custom_linear_model_forward.1} parent=1 // pred_fallthru
      _
    %365 = vsyncpa [#allocation3], 1
    %366 = vsyncpa [#allocation6], 1
    %367 = vsyncpa [#allocation4], 1

</llo_original>
